<compile_context>
chip_gen: v7x
topology: tpu7x:2x2x1
jax: 0.10.0
libtpu: 0.0.40
codegen_flags: <defaults>
</compile_context>

<pallas_src>
import functools

import jax
import jax.numpy as jnp
from jax.experimental import pallas as pl
from jax.experimental.pallas import tpu as pltpu

EPS = 1e-5  # nn.BatchNorm2d default eps


# ------------------------------- Kernel --------------------------------------
def _basic_block_kernel(x_ref, w1_ref, w2_ref, gmap_ref, gmapt_ref,
                        g1_ref, beta1_ref, g2_ref, beta2_ref, b3_ref,
                        o_ref, *, img_h):
    nh = x_ref.shape[0]                    # N*H rows
    cmid = gmap_ref.shape[0]               # planes
    wcmid = o_ref.shape[1]                 # W*planes (lane-dense, 128 here)
    w = wcmid // cmid
    inv_m = 1.0 / (nh * w)                 # 1 / (N*H*W)

    # Image-row boundary masks for the kh = -1 / +1 taps.  The sublane roll
    # wraps across image (and batch) boundaries; exactly those rows are zeroed
    # (r % H == 0 has no row above, r % H == H-1 has no row below).
    row = jax.lax.broadcasted_iota(jnp.int32, (nh, 1), 0)
    not_top = (row % img_h) != 0
    not_bot = (row % img_h) != (img_h - 1)

    gmap = gmap_ref[...]                   # (Cmid, W*Cmid)  channel -> lanes
    gmapt = gmapt_ref[...]                 # (W*Cmid, Cmid)  lanes  -> channel

    def conv_rows(lhs_bf16, w_ref, n_chunks):
        # One wide bf16 MXU matmul; combine kh = -1/0/+1 chunks with XLU
        # sublane rolls + boundary masks (no (NH,NH) matmuls).
        p = jnp.dot(lhs_bf16, w_ref[...], preferred_element_type=jnp.float32)
        p_m1 = p[:, 0:wcmid]               # contribution needed from row r-1
        p_0 = p[:, wcmid:2 * wcmid]
        p_p1 = p[:, 2 * wcmid:3 * wcmid]   # contribution needed from row r+1
        from_above = jnp.where(not_top, pltpu.roll(p_m1, shift=1, axis=0), 0.0)
        from_below = jnp.where(not_bot, pltpu.roll(p_p1, shift=nh - 1, axis=0), 0.0)
        acc = p_0 + from_above + from_below
        rest = p[:, 3 * wcmid:4 * wcmid] if n_chunks > 3 else None
        return acc, rest

    def batchnorm(acc, g_ref, beta_ref):
        # Per-channel batch stats in one pass; [sum; sum_sq] grouped across the
        # W lane-groups with a single small matmul, one more for [scale; shift].
        lane_s = jnp.sum(acc, axis=0, keepdims=True)              # (1, W*Cmid)
        lane_ss = jnp.sum(acc * acc, axis=0, keepdims=True)
        stats = jnp.concatenate([lane_s, lane_ss], axis=0)        # (2, W*Cmid)
        ch = jnp.dot(stats, gmapt, preferred_element_type=jnp.float32) * inv_m
        mean = ch[0:1, :]                                         # (1, Cmid)
        # clamp: E[x^2] - E[x]^2 can go slightly negative in f32 -> NaN guard
        var = jnp.maximum(ch[1:2, :] - mean * mean, 0.0)
        scale = g_ref[...] * jax.lax.rsqrt(var + EPS)             # EUP rsqrt
        shift = beta_ref[...] - mean * scale
        ss = jnp.concatenate([scale, shift], axis=0)              # (2, Cmid)
        ss_l = jnp.dot(ss, gmap, preferred_element_type=jnp.float32)
        return acc * ss_l[0:1, :] + ss_l[1:2, :]

    # conv1 (+ fused 1x1 identity conv) -> BN1 -> ReLU
    x = x_ref[...]                                                # bf16 (NH, W*Cin)
    acc1, ident = conv_rows(x, w1_ref, 4)
    ident = ident + b3_ref[...]                                   # 1x1 conv bias
    h = jnp.maximum(batchnorm(acc1, g1_ref, beta1_ref), 0.0)

    # conv2 -> BN2 -> + identity -> ReLU  (h never leaves VMEM)
    acc2, _ = conv_rows(h.astype(jnp.bfloat16), w2_ref, 3)
    out = jnp.maximum(batchnorm(acc2, g2_ref, beta2_ref) + ident, 0.0)
    o_ref[...] = out.astype(o_ref.dtype)


# ------------------------- One-time parameter packing -------------------------
def pack_params(params, W):
    """Fold kw taps + W zero-padding into banded weights, build lane<->channel
    maps. Run ONCE (eagerly) so jitted forward passes never redo this work."""
    f32 = jnp.float32
    Cmid = params["w1"].shape[-1]

    def banded(w_kh):                                   # w_kh: (3, Ci, Co)
        return sum(jnp.kron(jnp.eye(W, k=1 - t, dtype=f32), w_kh[t]) for t in range(3))

    w3b = jnp.kron(jnp.eye(W, dtype=f32), params["w3"])            # 1x1 identity conv
    w1_big = jnp.concatenate([banded(params["w1"][kh]) for kh in range(3)] + [w3b],
                             axis=1).astype(jnp.bfloat16)          # (W*Cin, 4*W*Cmid)
    w2_big = jnp.concatenate([banded(params["w2"][kh]) for kh in range(3)],
                             axis=1).astype(jnp.bfloat16)          # (W*Cmid, 3*W*Cmid)
    # NOTE: conv biases b1/b2 intentionally unused -- constants added before
    # training-mode (batch-stat) BatchNorm cancel exactly.  Not valid for
    # eval-mode running-stats BN.

    gmap = jnp.tile(jnp.eye(Cmid, dtype=f32), (1, W))              # (Cmid, W*Cmid)
    return {
        "w1_big": w1_big,
        "w2_big": w2_big,
        "gmap": gmap,
        "gmapt": gmap.T,
        "b3_lane": jnp.tile(params["b3"].astype(f32), (1, W)),     # (1, W*Cmid)
        "g1": params["g1"].astype(f32),
        "beta1": params["beta1"].astype(f32),
        "g2": params["g2"].astype(f32),
        "beta2": params["beta2"].astype(f32),
    }


# ------------------------------- Forward --------------------------------------
def basic_block_forward(x_nchw, packed):
    """x_nchw: (N, Cin, H, W) float32 -> (N, Cout, H, W) float32."""
    N, Cin, H, W = x_nchw.shape
    Cmid = packed["gmap"].shape[0]
    NH, WCin, WCmid = N * H, W * Cin, W * Cmid

    # activations: NCHW -> lane-dense row layout (N*H, W*Cin), bf16 MXU operand
    x_rows = jnp.transpose(x_nchw, (0, 2, 3, 1)).reshape(NH, WCin).astype(jnp.bfloat16)

    flops = (2 * NH * WCin * 4 * WCmid            # conv1 + fused identity
             + 2 * NH * WCmid * 3 * WCmid         # conv2
             + 16 * NH * WCmid)                   # rolls / masks / BN FMAs (approx)
    bytes_accessed = (NH * WCin * 2 + NH * WCmid * 4
                      + packed["w1_big"].size * 2 + packed["w2_big"].size * 2
                      + 2 * Cmid * WCmid * 4)

    vmem = pl.BlockSpec(memory_space=pltpu.MemorySpace.VMEM)
    out_rows = pl.pallas_call(
        functools.partial(_basic_block_kernel, img_h=H),
        out_shape=jax.ShapeDtypeStruct((NH, WCmid), jnp.float32),
        in_specs=[vmem] * 10,
        out_specs=vmem,
        cost_estimate=pl.CostEstimate(flops=flops, transcendentals=2 * Cmid,
                                      bytes_accessed=bytes_accessed),
    )(x_rows, packed["w1_big"], packed["w2_big"], packed["gmap"], packed["gmapt"],
      packed["g1"], packed["beta1"], packed["g2"], packed["beta2"],
      packed["b3_lane"])

    return jnp.transpose(out_rows.reshape(N, H, W, Cmid), (0, 3, 1, 2))


# --------------------------- Pure-JAX reference -------------------------------
def _reference(x_nchw, params):
    x = jnp.transpose(x_nchw, (0, 2, 3, 1))

    def conv3x3(y, w, b):
        return jax.lax.conv_general_dilated(
            y, w, (1, 1), "SAME",
            dimension_numbers=("NHWC", "HWIO", "NHWC")) + b

    def bn(y, g, beta):
        mean = jnp.mean(y, axis=(0, 1, 2), keepdims=True)
        var = jnp.mean((y - mean) ** 2, axis=(0, 1, 2), keepdims=True)
        return (y - mean) * jax.lax.rsqrt(var + EPS) * g + beta

    h = jax.nn.relu(bn(conv3x3(x, params["w1"], params["b1"]),
                       params["g1"], params["beta1"]))
    o = bn(conv3x3(h, params["w2"], params["b2"]),
           params["g2"], params["beta2"])
    ident = jnp.einsum("nhwc,co->nhwo", x, params["w3"]) + params["b3"]
    out = jax.nn.relu(o + ident)
    return jnp.transpose(out, (0, 3, 1, 2))


if __name__ == "__main__":
    # BasicBlock(inplanes=4, planes=8, stride=1, downsample=None)
    N, Cin, Cmid, H, W = 2, 4, 8, 16, 16

    key = jax.random.PRNGKey(0)
    ks = jax.random.split(key, 11)
    params = {
        # conv1: 3x3, inplanes->planes  (PyTorch (Cout,Cin,3,3) stored as (3,3,Cin,Cout))
        "w1": 0.1 * jax.random.normal(ks[0], (3, 3, Cin, Cmid), jnp.float32),
        "b1": 0.1 * jax.random.normal(ks[1], (1, Cmid), jnp.float32),
        "g1": 1.0 + 0.1 * jax.random.normal(ks[2], (1, Cmid), jnp.float32),
        "beta1": 0.1 * jax.random.normal(ks[3], (1, Cmid), jnp.float32),
        # conv2: 3x3, planes->planes
        "w2": 0.1 * jax.random.normal(ks[4], (3, 3, Cmid, Cmid), jnp.float32),
        "b2": 0.1 * jax.random.normal(ks[5], (1, Cmid), jnp.float32),
        "g2": 1.0 + 0.1 * jax.random.normal(ks[6], (1, Cmid), jnp.float32),
        "beta2": 0.1 * jax.random.normal(ks[7], (1, Cmid), jnp.float32),
        # 1x1 conv for identity path (inplanes != planes)
        "w3": 0.1 * jax.random.normal(ks[8], (Cin, Cmid), jnp.float32),
        "b3": 0.1 * jax.random.normal(ks[9], (1, Cmid), jnp.float32),
    }

    x = jax.random.normal(ks[10], (N, Cin, H, W), jnp.float32)

    packed = pack_params(params, W)                 # one-time packing (hoisted)
    fwd = jax.jit(basic_block_forward)

    out = jax.block_until_ready(fwd(x, packed))
    ref = jax.block_until_ready(_reference(x, params))

    assert out.shape == (N, Cmid, H, W), out.shape
    # matmul operands are bf16 (f32 accumulate / f32 BN), hence the loose tolerance
    err = float(jnp.max(jnp.abs(out - ref)))
    assert err < 5e-2, err
    print("KERNEL_OK")
</pallas_src>

<mosaic_0001>
module attributes {stable_mosaic.version = 11 : i64} {
  func.func @_basic_block_kernel(%arg0: memref<32x64xbf16, #tpu.memory_space<vmem>>, %arg1: memref<64x512xbf16, #tpu.memory_space<vmem>>, %arg2: memref<128x384xbf16, #tpu.memory_space<vmem>>, %arg3: memref<8x128xf32, #tpu.memory_space<vmem>>, %arg4: memref<128x8xf32, #tpu.memory_space<vmem>>, %arg5: memref<1x8xf32, #tpu.memory_space<vmem>>, %arg6: memref<1x8xf32, #tpu.memory_space<vmem>>, %arg7: memref<1x8xf32, #tpu.memory_space<vmem>>, %arg8: memref<1x8xf32, #tpu.memory_space<vmem>>, %arg9: memref<1x128xf32, #tpu.memory_space<vmem>>, %arg10: memref<32x128xf32, #tpu.memory_space<vmem>>) attributes {dimension_semantics = [], scalar_prefetch = 0 : i64, scratch_operands = 0 : i64, tpu.core_type = #tpu.core_type<tc>} {
    %0 = tpu.iota {dimensions = array<i32: 0>} : vector<32x1xi32>
    %c16_i32 = arith.constant 16 : i32
    %c0_i32 = arith.constant 0 : i32
    %1 = arith.cmpi eq, %c16_i32, %c0_i32 : i32
    %c1_i32 = arith.constant 1 : i32
    %2 = arith.select %1, %c1_i32, %c16_i32 : i32
    %3 = vector.broadcast %2 : i32 to vector<32x1xi32>
    %4 = arith.remsi %0, %3 : vector<32x1xi32>
    %c0_i32_0 = arith.constant 0 : i32
    %5 = vector.broadcast %c0_i32_0 : i32 to vector<32x1xi32>
    %6 = arith.cmpi ne, %4, %5 : vector<32x1xi32>
    %c0_i32_1 = arith.constant 0 : i32
    %7 = vector.broadcast %c0_i32_1 : i32 to vector<32x1xi32>
    %8 = arith.cmpi slt, %4, %7 : vector<32x1xi32>
    %c0_i32_2 = arith.constant 0 : i32
    %9 = arith.cmpi slt, %2, %c0_i32_2 : i32
    %10 = vector.broadcast %9 : i1 to vector<32x1xi1>
    %11 = vector.broadcast %10 : vector<32x1xi1> to vector<32x1xi1>
    %12 = arith.xori %8, %11 : vector<32x1xi1>
    %13 = arith.andi %12, %6 : vector<32x1xi1>
    %14 = vector.broadcast %2 : i32 to vector<32x1xi32>
    %15 = arith.addi %4, %14 : vector<32x1xi32>
    %16 = arith.select %13, %15, %4 : vector<32x1xi1>, vector<32x1xi32>
    %c0_i32_3 = arith.constant 0 : i32
    %17 = vector.broadcast %c0_i32_3 : i32 to vector<32x1xi32>
    %18 = arith.cmpi ne, %16, %17 : vector<32x1xi32>
    %c16_i32_4 = arith.constant 16 : i32
    %c0_i32_5 = arith.constant 0 : i32
    %19 = arith.cmpi eq, %c16_i32_4, %c0_i32_5 : i32
    %c1_i32_6 = arith.constant 1 : i32
    %20 = arith.select %19, %c1_i32_6, %c16_i32_4 : i32
    %21 = vector.broadcast %20 : i32 to vector<32x1xi32>
    %22 = arith.remsi %0, %21 : vector<32x1xi32>
    %c0_i32_7 = arith.constant 0 : i32
    %23 = vector.broadcast %c0_i32_7 : i32 to vector<32x1xi32>
    %24 = arith.cmpi ne, %22, %23 : vector<32x1xi32>
    %c0_i32_8 = arith.constant 0 : i32
    %25 = vector.broadcast %c0_i32_8 : i32 to vector<32x1xi32>
    %26 = arith.cmpi slt, %22, %25 : vector<32x1xi32>
    %c0_i32_9 = arith.constant 0 : i32
    %27 = arith.cmpi slt, %20, %c0_i32_9 : i32
    %28 = vector.broadcast %27 : i1 to vector<32x1xi1>
    %29 = vector.broadcast %28 : vector<32x1xi1> to vector<32x1xi1>
    %30 = arith.xori %26, %29 : vector<32x1xi1>
    %31 = arith.andi %30, %24 : vector<32x1xi1>
    %32 = vector.broadcast %20 : i32 to vector<32x1xi32>
    %33 = arith.addi %22, %32 : vector<32x1xi32>
    %34 = arith.select %31, %33, %22 : vector<32x1xi1>, vector<32x1xi32>
    %c15_i32 = arith.constant 15 : i32
    %35 = vector.broadcast %c15_i32 : i32 to vector<32x1xi32>
    %36 = arith.cmpi ne, %34, %35 : vector<32x1xi32>
    %c0 = arith.constant 0 : index
    %c0_10 = arith.constant 0 : index
    %37 = vector.load %arg3[%c0, %c0_10] : memref<8x128xf32, #tpu.memory_space<vmem>>, vector<8x128xf32>
    %c0_11 = arith.constant 0 : index
    %c0_12 = arith.constant 0 : index
    %38 = vector.load %arg4[%c0_11, %c0_12] : memref<128x8xf32, #tpu.memory_space<vmem>>, vector<128x8xf32>
    %c0_13 = arith.constant 0 : index
    %c0_14 = arith.constant 0 : index
    %39 = vector.load %arg0[%c0_13, %c0_14] : memref<32x64xbf16, #tpu.memory_space<vmem>>, vector<32x64xbf16>
    %c0_15 = arith.constant 0 : index
    %c0_16 = arith.constant 0 : index
    %40 = vector.load %arg1[%c0_15, %c0_16] : memref<64x512xbf16, #tpu.memory_space<vmem>>, vector<64x512xbf16>
    %cst = arith.constant dense<0.000000e+00> : vector<32x512xf32>
    %41 = tpu.matmul %39, %40, %cst {dimension_numbers = #tpu.dot_dimension_numbers<[1], [0], [0], [1], [0, 0, 1, 1], [], []>} : vector<32x64xbf16>, vector<64x512xbf16>, vector<32x512xf32> -> vector<32x512xf32>
    %42 = vector.extract_strided_slice %41 {offsets = [0, 0], sizes = [32, 128], strides = [1, 1]} : vector<32x512xf32> to vector<32x128xf32>
    %43 = vector.extract_strided_slice %41 {offsets = [0, 128], sizes = [32, 128], strides = [1, 1]} : vector<32x512xf32> to vector<32x128xf32>
    %44 = vector.extract_strided_slice %41 {offsets = [0, 256], sizes = [32, 128], strides = [1, 1]} : vector<32x512xf32> to vector<32x128xf32>
    %c1_i32_17 = arith.constant 1 : i32
    %45 = tpu.dynamic_rotate %42 by %c1_i32_17 dim 0 : vector<32x128xf32>, i32 -> vector<32x128xf32>
    %cst_18 = arith.constant 0.000000e+00 : f32
    %46 = vector.shape_cast %18 : vector<32x1xi1> to vector<32x1xi1>
    %47 = vector.broadcast %46 : vector<32x1xi1> to vector<32x128xi1>
    %48 = vector.broadcast %cst_18 : f32 to vector<32x128xf32>
    %49 = arith.select %47, %45, %48 : vector<32x128xi1>, vector<32x128xf32>
    %c31_i32 = arith.constant 31 : i32
    %50 = tpu.dynamic_rotate %44 by %c31_i32 dim 0 : vector<32x128xf32>, i32 -> vector<32x128xf32>
    %cst_19 = arith.constant 0.000000e+00 : f32
    %51 = vector.shape_cast %36 : vector<32x1xi1> to vector<32x1xi1>
    %52 = vector.broadcast %51 : vector<32x1xi1> to vector<32x128xi1>
    %53 = vector.broadcast %cst_19 : f32 to vector<32x128xf32>
    %54 = arith.select %52, %50, %53 : vector<32x128xi1>, vector<32x128xf32>
    %55 = arith.addf %43, %49 : vector<32x128xf32>
    %56 = arith.addf %55, %54 : vector<32x128xf32>
    %57 = vector.extract_strided_slice %41 {offsets = [0, 384], sizes = [32, 128], strides = [1, 1]} : vector<32x512xf32> to vector<32x128xf32>
    %c0_20 = arith.constant 0 : index
    %c0_21 = arith.constant 0 : index
    %58 = vector.load %arg9[%c0_20, %c0_21] : memref<1x128xf32, #tpu.memory_space<vmem>>, vector<1x128xf32>
    %59 = vector.broadcast %58 : vector<1x128xf32> to vector<32x128xf32>
    %60 = arith.addf %57, %59 : vector<32x128xf32>
    %cst_22 = arith.constant dense<0.000000e+00> : vector<128xf32>
    %61 = vector.multi_reduction <add>, %56, %cst_22 [0] : vector<32x128xf32> to vector<128xf32>
    %62 = vector.shape_cast %61 : vector<128xf32> to vector<1x128xf32>
    %63 = arith.mulf %56, %56 : vector<32x128xf32>
    %cst_23 = arith.constant dense<0.000000e+00> : vector<128xf32>
    %64 = vector.multi_reduction <add>, %63, %cst_23 [0] : vector<32x128xf32> to vector<128xf32>
    %65 = vector.shape_cast %64 : vector<128xf32> to vector<1x128xf32>
    %66 = tpu.concatenate %62, %65 in 0 : vector<1x128xf32>, vector<1x128xf32> -> vector<2x128xf32>
    %cst_24 = arith.constant dense<0.000000e+00> : vector<2x8xf32>
    %67 = tpu.matmul %66, %38, %cst_24 {dimension_numbers = #tpu.dot_dimension_numbers<[1], [0], [0], [1], [0, 0, 1, 1], [], []>} : vector<2x128xf32>, vector<128x8xf32>, vector<2x8xf32> -> vector<2x8xf32>
    %cst_25 = arith.constant 0.001953125 : f32
    %68 = vector.broadcast %cst_25 : f32 to vector<2x8xf32>
    %69 = arith.mulf %67, %68 : vector<2x8xf32>
    %70 = vector.extract_strided_slice %69 {offsets = [0, 0], sizes = [1, 8], strides = [1, 1]} : vector<2x8xf32> to vector<1x8xf32>
    %71 = vector.extract_strided_slice %69 {offsets = [1, 0], sizes = [1, 8], strides = [1, 1]} : vector<2x8xf32> to vector<1x8xf32>
    %72 = arith.mulf %70, %70 : vector<1x8xf32>
    %73 = arith.subf %71, %72 : vector<1x8xf32>
    %cst_26 = arith.constant 0.000000e+00 : f32
    %74 = vector.broadcast %cst_26 : f32 to vector<1x8xf32>
    %75 = arith.maximumf %73, %74 : vector<1x8xf32>
    %c0_27 = arith.constant 0 : index
    %c0_28 = arith.constant 0 : index
    %76 = vector.load %arg5[%c0_27, %c0_28] : memref<1x8xf32, #tpu.memory_space<vmem>>, vector<1x8xf32>
    %cst_29 = arith.constant 9.99999974E-6 : f32
    %77 = vector.broadcast %cst_29 : f32 to vector<1x8xf32>
    %78 = arith.addf %75, %77 : vector<1x8xf32>
    %79 = math.rsqrt %78 : vector<1x8xf32>
    %80 = arith.mulf %76, %79 : vector<1x8xf32>
    %c0_30 = arith.constant 0 : index
    %c0_31 = arith.constant 0 : index
    %81 = vector.load %arg6[%c0_30, %c0_31] : memref<1x8xf32, #tpu.memory_space<vmem>>, vector<1x8xf32>
    %82 = arith.mulf %70, %80 : vector<1x8xf32>
    %83 = arith.subf %81, %82 : vector<1x8xf32>
    %84 = tpu.concatenate %80, %83 in 0 : vector<1x8xf32>, vector<1x8xf32> -> vector<2x8xf32>
    %cst_32 = arith.constant dense<0.000000e+00> : vector<2x128xf32>
    %85 = tpu.matmul %84, %37, %cst_32 {dimension_numbers = #tpu.dot_dimension_numbers<[1], [0], [0], [1], [0, 0, 1, 1], [], []>} : vector<2x8xf32>, vector<8x128xf32>, vector<2x128xf32> -> vector<2x128xf32>
    %86 = vector.extract_strided_slice %85 {offsets = [0, 0], sizes = [1, 128], strides = [1, 1]} : vector<2x128xf32> to vector<1x128xf32>
    %87 = vector.broadcast %86 : vector<1x128xf32> to vector<32x128xf32>
    %88 = arith.mulf %56, %87 : vector<32x128xf32>
    %89 = vector.extract_strided_slice %85 {offsets = [1, 0], sizes = [1, 128], strides = [1, 1]} : vector<2x128xf32> to vector<1x128xf32>
    %90 = vector.broadcast %89 : vector<1x128xf32> to vector<32x128xf32>
    %91 = arith.addf %88, %90 : vector<32x128xf32>
    %cst_33 = arith.constant 0.000000e+00 : f32
    %92 = vector.broadcast %cst_33 : f32 to vector<32x128xf32>
    %93 = arith.maximumf %91, %92 : vector<32x128xf32>
    %94 = arith.truncf %93 : vector<32x128xf32> to vector<32x128xbf16>
    %c0_34 = arith.constant 0 : index
    %c0_35 = arith.constant 0 : index
    %95 = vector.load %arg2[%c0_34, %c0_35] : memref<128x384xbf16, #tpu.memory_space<vmem>>, vector<128x384xbf16>
    %cst_36 = arith.constant dense<0.000000e+00> : vector<32x384xf32>
    %96 = tpu.matmul %94, %95, %cst_36 {dimension_numbers = #tpu.dot_dimension_numbers<[1], [0], [0], [1], [0, 0, 1, 1], [], []>} : vector<32x128xbf16>, vector<128x384xbf16>, vector<32x384xf32> -> vector<32x384xf32>
    %97 = vector.extract_strided_slice %96 {offsets = [0, 0], sizes = [32, 128], strides = [1, 1]} : vector<32x384xf32> to vector<32x128xf32>
    %98 = vector.extract_strided_slice %96 {offsets = [0, 128], sizes = [32, 128], strides = [1, 1]} : vector<32x384xf32> to vector<32x128xf32>
    %99 = vector.extract_strided_slice %96 {offsets = [0, 256], sizes = [32, 128], strides = [1, 1]} : vector<32x384xf32> to vector<32x128xf32>
    %c1_i32_37 = arith.constant 1 : i32
    %100 = tpu.dynamic_rotate %97 by %c1_i32_37 dim 0 : vector<32x128xf32>, i32 -> vector<32x128xf32>
    %cst_38 = arith.constant 0.000000e+00 : f32
    %101 = vector.shape_cast %18 : vector<32x1xi1> to vector<32x1xi1>
    %102 = vector.broadcast %101 : vector<32x1xi1> to vector<32x128xi1>
    %103 = vector.broadcast %cst_38 : f32 to vector<32x128xf32>
    %104 = arith.select %102, %100, %103 : vector<32x128xi1>, vector<32x128xf32>
    %c31_i32_39 = arith.constant 31 : i32
    %105 = tpu.dynamic_rotate %99 by %c31_i32_39 dim 0 : vector<32x128xf32>, i32 -> vector<32x128xf32>
    %cst_40 = arith.constant 0.000000e+00 : f32
    %106 = vector.shape_cast %36 : vector<32x1xi1> to vector<32x1xi1>
    %107 = vector.broadcast %106 : vector<32x1xi1> to vector<32x128xi1>
    %108 = vector.broadcast %cst_40 : f32 to vector<32x128xf32>
    %109 = arith.select %107, %105, %108 : vector<32x128xi1>, vector<32x128xf32>
    %110 = arith.addf %98, %104 : vector<32x128xf32>
    %111 = arith.addf %110, %109 : vector<32x128xf32>
    %cst_41 = arith.constant dense<0.000000e+00> : vector<128xf32>
    %112 = vector.multi_reduction <add>, %111, %cst_41 [0] : vector<32x128xf32> to vector<128xf32>
    %113 = vector.shape_cast %112 : vector<128xf32> to vector<1x128xf32>
    %114 = arith.mulf %111, %111 : vector<32x128xf32>
    %cst_42 = arith.constant dense<0.000000e+00> : vector<128xf32>
    %115 = vector.multi_reduction <add>, %114, %cst_42 [0] : vector<32x128xf32> to vector<128xf32>
    %116 = vector.shape_cast %115 : vector<128xf32> to vector<1x128xf32>
    %117 = tpu.concatenate %113, %116 in 0 : vector<1x128xf32>, vector<1x128xf32> -> vector<2x128xf32>
    %cst_43 = arith.constant dense<0.000000e+00> : vector<2x8xf32>
    %118 = tpu.matmul %117, %38, %cst_43 {dimension_numbers = #tpu.dot_dimension_numbers<[1], [0], [0], [1], [0, 0, 1, 1], [], []>} : vector<2x128xf32>, vector<128x8xf32>, vector<2x8xf32> -> vector<2x8xf32>
    %cst_44 = arith.constant 0.001953125 : f32
    %119 = vector.broadcast %cst_44 : f32 to vector<2x8xf32>
    %120 = arith.mulf %118, %119 : vector<2x8xf32>
    %121 = vector.extract_strided_slice %120 {offsets = [0, 0], sizes = [1, 8], strides = [1, 1]} : vector<2x8xf32> to vector<1x8xf32>
    %122 = vector.extract_strided_slice %120 {offsets = [1, 0], sizes = [1, 8], strides = [1, 1]} : vector<2x8xf32> to vector<1x8xf32>
    %123 = arith.mulf %121, %121 : vector<1x8xf32>
    %124 = arith.subf %122, %123 : vector<1x8xf32>
    %cst_45 = arith.constant 0.000000e+00 : f32
    %125 = vector.broadcast %cst_45 : f32 to vector<1x8xf32>
    %126 = arith.maximumf %124, %125 : vector<1x8xf32>
    %c0_46 = arith.constant 0 : index
    %c0_47 = arith.constant 0 : index
    %127 = vector.load %arg7[%c0_46, %c0_47] : memref<1x8xf32, #tpu.memory_space<vmem>>, vector<1x8xf32>
    %cst_48 = arith.constant 9.99999974E-6 : f32
    %128 = vector.broadcast %cst_48 : f32 to vector<1x8xf32>
    %129 = arith.addf %126, %128 : vector<1x8xf32>
    %130 = math.rsqrt %129 : vector<1x8xf32>
    %131 = arith.mulf %127, %130 : vector<1x8xf32>
    %c0_49 = arith.constant 0 : index
    %c0_50 = arith.constant 0 : index
    %132 = vector.load %arg8[%c0_49, %c0_50] : memref<1x8xf32, #tpu.memory_space<vmem>>, vector<1x8xf32>
    %133 = arith.mulf %121, %131 : vector<1x8xf32>
    %134 = arith.subf %132, %133 : vector<1x8xf32>
    %135 = tpu.concatenate %131, %134 in 0 : vector<1x8xf32>, vector<1x8xf32> -> vector<2x8xf32>
    %cst_51 = arith.constant dense<0.000000e+00> : vector<2x128xf32>
    %136 = tpu.matmul %135, %37, %cst_51 {dimension_numbers = #tpu.dot_dimension_numbers<[1], [0], [0], [1], [0, 0, 1, 1], [], []>} : vector<2x8xf32>, vector<8x128xf32>, vector<2x128xf32> -> vector<2x128xf32>
    %137 = vector.extract_strided_slice %136 {offsets = [0, 0], sizes = [1, 128], strides = [1, 1]} : vector<2x128xf32> to vector<1x128xf32>
    %138 = vector.broadcast %137 : vector<1x128xf32> to vector<32x128xf32>
    %139 = arith.mulf %111, %138 : vector<32x128xf32>
    %140 = vector.extract_strided_slice %136 {offsets = [1, 0], sizes = [1, 128], strides = [1, 1]} : vector<2x128xf32> to vector<1x128xf32>
    %141 = vector.broadcast %140 : vector<1x128xf32> to vector<32x128xf32>
    %142 = arith.addf %139, %141 : vector<32x128xf32>
    %143 = arith.addf %142, %60 : vector<32x128xf32>
    %cst_52 = arith.constant 0.000000e+00 : f32
    %144 = vector.broadcast %cst_52 : f32 to vector<32x128xf32>
    %145 = arith.maximumf %143, %144 : vector<32x128xf32>
    %c0_53 = arith.constant 0 : index
    %c0_54 = arith.constant 0 : index
    %146 = vector.load %arg10[%c0_53, %c0_54] : memref<32x128xf32, #tpu.memory_space<vmem>>, vector<32x128xf32>
    tpu.vector_store %arg10[%c0_53, %c0_54], %145 {strides = array<i32>} : memref<32x128xf32, #tpu.memory_space<vmem>>, vector<32x128xf32>,
    return
  }
}

</mosaic_0001>

<llo_original>
// kernel: basic_block_forward.1
$region0: #{basic_block_forward.1}
  #allocation0 [shape = 'u32[]', space=smem, size = 0x4, offset = 0x4, fixed_abs, tag = 'smem constant byte address 0x4 - core index']
  #allocation1 [shape = 'u32[144,128]{1,0:T(1,128)}', space=vmem, size = 0x12000, scoped, tag = 'internal scratch']
  %s0 = inlined_call_operand.vmem [shape: bf16[32,64], index: 0, kind: input, shape index: {}]
  %s1 = inlined_call_operand.vmem [shape: bf16[64,512], index: 1, kind: input, shape index: {}]
  %s2 = inlined_call_operand.vmem [shape: bf16[128,384], index: 2, kind: input, shape index: {}]
  %s3 = inlined_call_operand.vmem [shape: f32[8,128], index: 3, kind: input, shape index: {}]
  %s4 = inlined_call_operand.vmem [shape: f32[128,8], index: 4, kind: input, shape index: {}]
  %s5 = inlined_call_operand.vmem [shape: f32[1,8], index: 5, kind: input, shape index: {}]
  %s6 = inlined_call_operand.vmem [shape: f32[1,8], index: 6, kind: input, shape index: {}]
  %s7 = inlined_call_operand.vmem [shape: f32[1,8], index: 7, kind: input, shape index: {}]
  %s8 = inlined_call_operand.vmem [shape: f32[1,8], index: 8, kind: input, shape index: {}]
  %s9 = inlined_call_operand.vmem [shape: f32[1,128], index: 9, kind: input, shape index: {}]
  %s10 = inlined_call_operand.vmem [shape: f32[32,128], index: 10, kind: output, shape index: {}]
  %s11 = sld [smem:[#allocation0]]
  $region50: #{basic_block_forward.1} parent=0
    _
  %s13 = ssub.s32 1, %s11
  %s14 = scalar_select 0, %s13, %s11
  // Predicated region
  $region2: #{basic_block_forward.1} parent=0 // pred_check
    _
  $region3: #{basic_block_forward.1} parent=0 // pred_check_branch
    %16 = sbr.rel (0) target = $region5
  $region4: #{basic_block_forward.1} parent=0 // pred_region
    _
  $region5: #{basic_block_forward.1} parent=0 // pred_fallthru
    _
  // Predicated region
  $region6: #{basic_block_forward.1} parent=0 // pred_check
    _
  $region7: #{basic_block_forward.1} parent=0 // pred_check_branch
    %18 = sbr.rel (0) target = $region9
  $region8: #{basic_block_forward.1} parent=0 // pred_region
    _
  $region9: #{basic_block_forward.1} parent=0 // pred_fallthru
    _
  // Predicated region
  $region10: #{basic_block_forward.1} parent=0 // pred_check
    _
  $region11: #{basic_block_forward.1} parent=0 // pred_check_branch
    %20 = sbr.rel (0) target = $region13
  $region12: #{basic_block_forward.1} parent=0 // pred_region
    _
  $region13: #{basic_block_forward.1} parent=0 // pred_fallthru
    _
  // Predicated region
  $region14: #{basic_block_forward.1} parent=0 // pred_check
    _
  $region15: #{basic_block_forward.1} parent=0 // pred_check_branch
    %22 = sbr.rel (0) target = $region17
  $region16: #{basic_block_forward.1} parent=0 // pred_region
    _
  $region17: #{basic_block_forward.1} parent=0 // pred_fallthru
    _
  // Predicated region
  $region18: #{basic_block_forward.1} parent=0 // pred_check
    _
  $region19: #{basic_block_forward.1} parent=0 // pred_check_branch
    %24 = sbr.rel (0) target = $region21
  $region20: #{basic_block_forward.1} parent=0 // pred_region
    _
  $region21: #{basic_block_forward.1} parent=0 // pred_fallthru
    _
  // Predicated region
  $region22: #{basic_block_forward.1} parent=0 // pred_check
    _
  $region23: #{basic_block_forward.1} parent=0 // pred_check_branch
    %26 = sbr.rel (0) target = $region25
  $region24: #{basic_block_forward.1} parent=0 // pred_region
    _
  $region25: #{basic_block_forward.1} parent=0 // pred_fallthru
    _
  // Predicated region
  $region26: #{basic_block_forward.1} parent=0 // pred_check
    _
  $region27: #{basic_block_forward.1} parent=0 // pred_check_branch
    %28 = sbr.rel (0) target = $region29
  $region28: #{basic_block_forward.1} parent=0 // pred_region
    _
  $region29: #{basic_block_forward.1} parent=0 // pred_fallthru
    _
  // Predicated region
  $region30: #{basic_block_forward.1} parent=0 // pred_check
    _
  $region31: #{basic_block_forward.1} parent=0 // pred_check_branch
    %30 = sbr.rel (0) target = $region33
  $region32: #{basic_block_forward.1} parent=0 // pred_region
    _
  $region33: #{basic_block_forward.1} parent=0 // pred_fallthru
    _
  // Predicated region
  $region34: #{basic_block_forward.1} parent=0 // pred_check
    _
  $region35: #{basic_block_forward.1} parent=0 // pred_check_branch
    %32 = sbr.rel (0) target = $region37
  $region36: #{basic_block_forward.1} parent=0 // pred_region
    _
  $region37: #{basic_block_forward.1} parent=0 // pred_fallthru
    _
  // Predicated region
  $region38: #{basic_block_forward.1} parent=0 // pred_check
    _
  $region39: #{basic_block_forward.1} parent=0 // pred_check_branch
    %34 = sbr.rel (0) target = $region41
  $region40: #{basic_block_forward.1} parent=0 // pred_region
    _
  $region41: #{basic_block_forward.1} parent=0 // pred_fallthru
    _
  %v36 = vlaneseq
  %v37 = vshrl.u32 %v36, 7
  %v38 = vadd.s32 %v37, 8
  %v39 = vadd.s32 %v37, 16
  %v40 = vadd.s32 %v37, 24
  %vm41 = vcmp.lt.s32.totalorder %v37, 0
  %v42 = vsub.s32 0, %v37
  %v43 = vsel %vm41, %v42, %v37
  %v44 = vshrl.u32 %v43, 4
  %v45 = vand.u32 %v43, 15
  %v46 = vsub.s32 0, %v45
  %v47 = vsel %vm41, %v46, %v45
  %vm48 = vcmp.lt.s32.totalorder %v38, 0
  %v49 = vsub.s32 0, %v38
  %v50 = vsel %vm48, %v49, %v38
  %v51 = vshrl.u32 %v50, 4
  %v52 = vand.u32 %v50, 15
  %v53 = vsub.s32 0, %v52
  %v54 = vsel %vm48, %v53, %v52
  %vm55 = vcmp.lt.s32.totalorder %v39, 0
  %v56 = vsub.s32 0, %v39
  %v57 = vsel %vm55, %v56, %v39
  %v58 = vshrl.u32 %v57, 4
  %v59 = vand.u32 %v57, 15
  %v60 = vsub.s32 0, %v59
  %v61 = vsel %vm55, %v60, %v59
  %vm62 = vcmp.lt.s32.totalorder %v40, 0
  %v63 = vsub.s32 0, %v40
  %v64 = vsel %vm62, %v63, %v40
  %v65 = vshrl.u32 %v64, 4
  %v66 = vand.u32 %v64, 15
  %v67 = vsub.s32 0, %v66
  %v68 = vsel %vm62, %v67, %v66
  %vm69 = vcmp.ne.s32.totalorder %v47, 0
  %vm70 = vcmp.ne.s32.totalorder %v54, 0
  %vm71 = vcmp.ne.s32.totalorder %v61, 0
  %vm72 = vcmp.ne.s32.totalorder %v68, 0
  %vm73 = vcmp.lt.s32.totalorder %v47, 0
  %vm74 = vcmp.lt.s32.totalorder %v54, 0
  %vm75 = vcmp.lt.s32.totalorder %v61, 0
  %vm76 = vcmp.lt.s32.totalorder %v68, 0
  %vm77 = vmand %vm73, %vm69
  %vm78 = vmand %vm74, %vm70
  %vm79 = vmand %vm75, %vm71
  %vm80 = vmand %vm76, %vm72
  %v81 = vadd.s32 %v47, 16
  %v82 = vadd.s32 %v54, 16
  %v83 = vadd.s32 %v61, 16
  %v84 = vadd.s32 %v68, 16
  %v85 = vsel %vm77, %v81, %v47
  %v86 = vsel %vm78, %v82, %v54
  %v87 = vsel %vm79, %v83, %v61
  %v88 = vsel %vm80, %v84, %v68
  %vm89 = vcmp.ne.s32.totalorder %v85, 0
  %vm90 = vcmp.ne.s32.totalorder %v86, 0
  %vm91 = vcmp.ne.s32.totalorder %v87, 0
  %vm92 = vcmp.ne.s32.totalorder %v88, 0
  %vm93 = vcmp.ne.s32.totalorder %v85, 15
  %vm94 = vcmp.ne.s32.totalorder %v86, 15
  %vm95 = vcmp.ne.s32.totalorder %v87, 15
  %vm96 = vcmp.ne.s32.totalorder %v88, 15
  %v97 = vld [vmem:[%s3] sm:$0xff]
  %v98 = vld [vmem:[%s4] sm:$0xff]
  %v99 = vld [vmem:[%s4 + $0x8] sm:$0xff]
  %v100 = vld [vmem:[%s4 + $0x10] sm:$0xff]
  %v101 = vld [vmem:[%s4 + $0x18] sm:$0xff]
  %v102 = vld [vmem:[%s4 + $0x20] sm:$0xff]
  %v103 = vld [vmem:[%s4 + $0x28] sm:$0xff]
  %v104 = vld [vmem:[%s4 + $0x30] sm:$0xff]
  %v105 = vld [vmem:[%s4 + $0x38] sm:$0xff]
  %v106 = vld [vmem:[%s4 + $0x40] sm:$0xff]
  %v107 = vld [vmem:[%s4 + $0x48] sm:$0xff]
  %v108 = vld [vmem:[%s4 + $0x50] sm:$0xff]
  %v109 = vld [vmem:[%s4 + $0x58] sm:$0xff]
  %v110 = vld [vmem:[%s4 + $0x60] sm:$0xff]
  %v111 = vld [vmem:[%s4 + $0x68] sm:$0xff]
  %v112 = vld [vmem:[%s4 + $0x70] sm:$0xff]
  %v113 = vld [vmem:[%s4 + $0x78] sm:$0xff]
  %v114 = vld [vmem:[%s0] sm:$0xf]
  %v115 = vld [vmem:[%s0 + $0x4] sm:$0xf]
  %v116 = vld [vmem:[%s0 + $0x8] sm:$0xf]
  %v117 = vld [vmem:[%s0 + $0xc] sm:$0xf]
  %v118 = vld [vmem:[%s1] sm:$0xff]
  %v119 = vld [vmem:[%s1 + $0x8] sm:$0xff]
  %v120 = vld [vmem:[%s1 + $0x10] sm:$0xff]
  %v121 = vld [vmem:[%s1 + $0x18] sm:$0xff]
  %v122 = vld [vmem:[%s1 + $0x20] sm:$0xff]
  %v123 = vld [vmem:[%s1 + $0x28] sm:$0xff]
  %v124 = vld [vmem:[%s1 + $0x30] sm:$0xff]
  %v125 = vld [vmem:[%s1 + $0x38] sm:$0xff]
  %v126 = vld [vmem:[%s1 + $0x40] sm:$0xff]
  %v127 = vld [vmem:[%s1 + $0x48] sm:$0xff]
  %v128 = vld [vmem:[%s1 + $0x50] sm:$0xff]
  %v129 = vld [vmem:[%s1 + $0x58] sm:$0xff]
  %v130 = vld [vmem:[%s1 + $0x60] sm:$0xff]
  %v131 = vld [vmem:[%s1 + $0x68] sm:$0xff]
  %v132 = vld [vmem:[%s1 + $0x70] sm:$0xff]
  %v133 = vld [vmem:[%s1 + $0x78] sm:$0xff]
  %v138 = vunpack.c.l.b16 %v114
  %v139 = vunpack.c.l.b16 %v115
  %v140 = vunpack.c.l.b16 %v116
  %v141 = vunpack.c.l.b16 %v117
  %v142 = vpack.c.b16 %v139, %v138
  %v143 = vpack.c.b16 %v141, %v140
  %v160 = vunpack.c.l.b16 %v118
  %v161 = vunpack.c.h.b16 %v118
  %v162 = vunpack.c.l.b16 %v119
  %v163 = vunpack.c.h.b16 %v119
  %v164 = vunpack.c.l.b16 %v120
  %v165 = vunpack.c.h.b16 %v120
  %v166 = vunpack.c.l.b16 %v121
  %v167 = vunpack.c.h.b16 %v121
  %v168 = vunpack.c.l.b16 %v122
  %v169 = vunpack.c.h.b16 %v122
  %v170 = vunpack.c.l.b16 %v123
  %v171 = vunpack.c.h.b16 %v123
  %v172 = vunpack.c.l.b16 %v124
  %v173 = vunpack.c.h.b16 %v124
  %v174 = vunpack.c.l.b16 %v125
  %v175 = vunpack.c.h.b16 %v125
  %v176 = vunpack.c.l.b16 %v126
  %v177 = vunpack.c.h.b16 %v126
  %v178 = vunpack.c.l.b16 %v127
  %v179 = vunpack.c.h.b16 %v127
  %v180 = vunpack.c.l.b16 %v128
  %v181 = vunpack.c.h.b16 %v128
  %v182 = vunpack.c.l.b16 %v129
  %v183 = vunpack.c.h.b16 %v129
  %v184 = vunpack.c.l.b16 %v130
  %v185 = vunpack.c.h.b16 %v130
  %v186 = vunpack.c.l.b16 %v131
  %v187 = vunpack.c.h.b16 %v131
  %v188 = vunpack.c.l.b16 %v132
  %v189 = vunpack.c.h.b16 %v132
  %v190 = vunpack.c.l.b16 %v133
  %v191 = vunpack.c.h.b16 %v133
  %v192 = vpack.c.b16 %v164, %v160
  %v193 = vpack.c.b16 %v165, %v161
  %v194 = vpack.c.b16 %v166, %v162
  %v195 = vpack.c.b16 %v167, %v163
  %v196 = vpack.c.b16 %v172, %v168
  %v197 = vpack.c.b16 %v173, %v169
  %v198 = vpack.c.b16 %v174, %v170
  %v199 = vpack.c.b16 %v175, %v171
  %v200 = vpack.c.b16 %v180, %v176
  %v201 = vpack.c.b16 %v181, %v177
  %v202 = vpack.c.b16 %v182, %v178
  %v203 = vpack.c.b16 %v183, %v179
  %v204 = vpack.c.b16 %v188, %v184
  %v205 = vpack.c.b16 %v189, %v185
  %v206 = vpack.c.b16 %v190, %v186
  %v207 = vpack.c.b16 %v191, %v187
  %vm224 = vcmask 523264
  %v226 = vsel %vm224, %v142, 0
  %v229 = vsel %vm224, %v143, 0
  %231 = vmatprep.subr.bf16.mxu0 %v193
  %232 = vmatpush1.bf16.msra.mxu0 %v192
  %233 = vmatprep.subr.bf16.mxu0 %v197
  %234 = vmatpush1.bf16.msra.mxu0 %v196
  %235 = vmatprep.subr.bf16.mxu0 %v201
  %236 = vmatpush1.bf16.msra.mxu0 %v200
  %237 = vmatprep.subr.bf16.mxu0 %v205
  %238 = vmatpush1.bf16.msra.mxu0 %v204
  %239 = vmatprep.subr.bf16.mxu0 0
  %240 = vmatpush1.bf16.msra.mxu0 0
  %241 = vmatprep.subr.bf16.mxu0 0
  %242 = vmatpush1.bf16.msra.mxu0 0
  %243 = vmatprep.subr.bf16.mxu0 0
  %244 = vmatpush1.bf16.msra.mxu0 0
  %245 = vmatprep.subr.bf16.mxu0 0
  %246 = vmatpush1.bf16.msra.mxu0 0
  %247 = vmatprep.subr.bf16.mxu0 0
  %248 = vmatpush1.bf16.msra.mxu0 0
  %249 = vmatprep.subr.bf16.mxu0 0
  %250 = vmatpush1.bf16.msra.mxu0 0
  %251 = vmatprep.subr.bf16.mxu0 0
  %252 = vmatpush1.bf16.msra.mxu0 0
  %253 = vmatprep.subr.bf16.mxu0 0
  %254 = vmatpush1.bf16.msra.mxu0 0
  %255 = vmatprep.subr.bf16.mxu0 0
  %256 = vmatpush1.bf16.msra.mxu0 0
  %257 = vmatprep.subr.bf16.mxu0 0
  %258 = vmatpush1.bf16.msra.mxu0 0
  %259 = vmatprep.subr.bf16.mxu0 0
  %260 = vmatpush1.bf16.msra.mxu0 0
  %261 = vmatprep.subr.bf16.mxu0 0
  %262 = vmatpush1.bf16.msra.mxu0 0
  %263 = vmatprep.mubr.bf16.mxu0 0
  %264 = vmatmul.mubr.bf16.gmra.mrb[0].mxu0 %v226
  %v265 = vpop.f32.mrb[0].mxu0
  %v266 = vadd.f32 0.0, %v265
  %v267 = vpop.f32.mrb[0].mxu0
  %v268 = vadd.f32 0.0, %v267
  %v269 = vpop.f32.mrb[0].mxu0
  %v270 = vadd.f32 0.0, %v269
  %v271 = vpop.f32.mrb[0].mxu0
  %v272 = vadd.f32 0.0, %v271
  %273 = vmatprep.mubr.bf16.mxu0 0
  %274 = vmatmul.mubr.bf16.gmra.mrb[0].mxu0 %v229
  %v275 = vpop.f32.mrb[0].mxu0
  %v276 = vadd.f32 0.0, %v275
  %v277 = vpop.f32.mrb[0].mxu0
  %v278 = vadd.f32 0.0, %v277
  %v279 = vpop.f32.mrb[0].mxu0
  %v280 = vadd.f32 0.0, %v279
  %v281 = vpop.f32.mrb[0].mxu0
  %v282 = vadd.f32 0.0, %v281
  %283 = vdwg.mxu0
  %284 = vmatprep.subr.bf16.mxu0 %v195
  %285 = vmatpush1.bf16.msra.mxu0 %v194
  %286 = vmatprep.subr.bf16.mxu0 %v199
  %287 = vmatpush1.bf16.msra.mxu0 %v198
  %288 = vmatprep.subr.bf16.mxu0 %v203
  %289 = vmatpush1.bf16.msra.mxu0 %v202
  %290 = vmatprep.subr.bf16.mxu0 %v207
  %291 = vmatpush1.bf16.msra.mxu0 %v206
  %292 = vmatprep.subr.bf16.mxu0 0
  %293 = vmatpush1.bf16.msra.mxu0 0
  %294 = vmatprep.subr.bf16.mxu0 0
  %295 = vmatpush1.bf16.msra.mxu0 0
  %296 = vmatprep.subr.bf16.mxu0 0
  %297 = vmatpush1.bf16.msra.mxu0 0
  %298 = vmatprep.subr.bf16.mxu0 0
  %299 = vmatpush1.bf16.msra.mxu0 0
  %300 = vmatprep.subr.bf16.mxu0 0
  %301 = vmatpush1.bf16.msra.mxu0 0
  %302 = vmatprep.subr.bf16.mxu0 0
  %303 = vmatpush1.bf16.msra.mxu0 0
  %304 = vmatprep.subr.bf16.mxu0 0
  %305 = vmatpush1.bf16.msra.mxu0 0
  %306 = vmatprep.subr.bf16.mxu0 0
  %307 = vmatpush1.bf16.msra.mxu0 0
  %308 = vmatprep.subr.bf16.mxu0 0
  %309 = vmatpush1.bf16.msra.mxu0 0
  %310 = vmatprep.subr.bf16.mxu0 0
  %311 = vmatpush1.bf16.msra.mxu0 0
  %312 = vmatprep.subr.bf16.mxu0 0
  %313 = vmatpush1.bf16.msra.mxu0 0
  %314 = vmatprep.subr.bf16.mxu0 0
  %315 = vmatpush1.bf16.msra.mxu0 0
  %316 = vmatprep.mubr.bf16.mxu0 0
  %317 = vmatmul.mubr.bf16.gmra.mrb[0].mxu0 %v226
  %v318 = vpop.f32.mrb[0].mxu0
  %v319 = vadd.f32 0.0, %v318
  %v320 = vpop.f32.mrb[0].mxu0
  %v321 = vadd.f32 0.0, %v320
  %v322 = vpop.f32.mrb[0].mxu0
  %v323 = vadd.f32 0.0, %v322
  %v324 = vpop.f32.mrb[0].mxu0
  %v325 = vadd.f32 0.0, %v324
  %326 = vmatprep.mubr.bf16.mxu0 0
  %327 = vmatmul.mubr.bf16.gmra.mrb[0].mxu0 %v229
  %v328 = vpop.f32.mrb[0].mxu0
  %v329 = vadd.f32 0.0, %v328
  %v330 = vpop.f32.mrb[0].mxu0
  %v331 = vadd.f32 0.0, %v330
  %v332 = vpop.f32.mrb[0].mxu0
  %v333 = vadd.f32 0.0, %v332
  %v334 = vpop.f32.mrb[0].mxu0
  %v335 = vadd.f32 0.0, %v334
  %336 = vdwg.mxu0
  %v337 = vrot.slane %v266, 7
  %v338 = vrot.slane %v270, 7
  %v339 = vrot.slane %v276, 7
  %v340 = vrot.slane %v280, 7
  %vm341 = vcmp.lt.s32.totalorder %v37, 1
  %v342 = vsel %vm341, %v339, %v340
  %v343 = vsel %vm341, %v338, %v339
  %v344 = vsel %vm341, %v337, %v338
  %v345 = vsel %vm341, %v340, %v337
  %v346 = vsel %vm89, 1, 0
  %v347 = vsel %vm90, 1, 0
  %v348 = vsel %vm91, 1, 0
  %v349 = vsel %vm92, 1, 0
  %vm350 = vcmp.eq.s32.totalorder %v346, 1
  %vm351 = vcmp.eq.s32.totalorder %v347, 1
  %vm352 = vcmp.eq.s32.totalorder %v348, 1
  %vm353 = vcmp.eq.s32.totalorder %v349, 1
  %v354 = vsel %vm350, %v345, 0.0
  %v355 = vsel %vm351, %v344, 0.0
  %v356 = vsel %vm352, %v343, 0.0
  %v357 = vsel %vm353, %v342, 0.0
  %v358 = vrot.slane %v319, 1
  %v359 = vrot.slane %v323, 1
  %v360 = vrot.slane %v329, 1
  %v361 = vrot.slane %v333, 1
  %vm362 = vcmp.lt.s32.totalorder %v37, 7
  %v363 = vsel %vm362, %v360, %v361
  %v364 = vsel %vm362, %v359, %v360
  %v365 = vsel %vm362, %v358, %v359
  %v366 = vsel %vm362, %v361, %v358
  %v367 = vsel %vm93, 1, 0
  %v368 = vsel %vm94, 1, 0
  %v369 = vsel %vm95, 1, 0
  %v370 = vsel %vm96, 1, 0
  %vm371 = vcmp.eq.s32.totalorder %v367, 1
  %vm372 = vcmp.eq.s32.totalorder %v368, 1
  %vm373 = vcmp.eq.s32.totalorder %v369, 1
  %vm374 = vcmp.eq.s32.totalorder %v370, 1
  %v375 = vsel %vm371, %v365, 0.0
  %v376 = vsel %vm372, %v364, 0.0
  %v377 = vsel %vm373, %v363, 0.0
  %v378 = vsel %vm374, %v366, 0.0
  %v379 = vadd.f32 %v268, %v354
  %v380 = vadd.f32 %v272, %v355
  %v381 = vadd.f32 %v278, %v356
  %v382 = vadd.f32 %v282, %v357
  %v383 = vadd.f32 %v379, %v375
  %v384 = vadd.f32 %v380, %v376
  %v385 = vadd.f32 %v381, %v377
  %v386 = vadd.f32 %v382, %v378
  %v387 = vld [vmem:[%s9] sm:$0x1]
  %v389 = vlaneseq
  %v390 = vshrl.u32 %v389, 7
  %v391 = vsub.s32 0, %v390
  %v392 = vrot.slane %v387, %v391
  %v394 = vadd.f32 %v321, %v392
  %v395 = vadd.f32 %v325, %v392
  %v396 = vadd.f32 %v331, %v392
  %v397 = vadd.f32 %v335, %v392
  %v398 = vadd.f32 %v383, %v384
  %v399 = vadd.f32 %v398, %v385
  %v400 = vadd.f32 %v399, %v386
  %v401 = vrot.slane %v400, 4
  %v402 = vadd.f32 %v400, %v401
  %v403 = vrot.slane %v402, 2
  %v404 = vadd.f32 %v402, %v403
  %v405 = vrot.slane %v404, 1
  %v406 = vadd.f32 %v404, %v405
  %v407 = vmul.f32 %v383, %v383
  %v408 = vmul.f32 %v384, %v384
  %v409 = vmul.f32 %v385, %v385
  %v410 = vmul.f32 %v386, %v386
  %v411 = vadd.f32 %v407, %v408
  %v412 = vadd.f32 %v411, %v409
  %v413 = vadd.f32 %v412, %v410
  %v414 = vrot.slane %v413, 4
  %v415 = vadd.f32 %v413, %v414
  %v416 = vrot.slane %v415, 2
  %v417 = vadd.f32 %v415, %v416
  %v418 = vrot.slane %v417, 1
  %v419 = vadd.f32 %v417, %v418
  %vm420 = vcmask 1040384
  %v421 = vsel %vm420, %v406, %v419
  %422 = vmatprep.subr.mxu0 0.0
  %423 = vmatpush1.msra.mxu0 %v98
  %424 = vmatprep.subr.mxu0 0.0
  %425 = vmatpush1.msra.mxu0 %v99
  %426 = vmatprep.subr.mxu0 0.0
  %427 = vmatpush1.msra.mxu0 %v100
  %428 = vmatprep.subr.mxu0 0.0
  %429 = vmatpush1.msra.mxu0 %v101
  %430 = vmatprep.subr.mxu0 0.0
  %431 = vmatpush1.msra.mxu0 %v102
  %432 = vmatprep.subr.mxu0 0.0
  %433 = vmatpush1.msra.mxu0 %v103
  %434 = vmatprep.subr.mxu0 0.0
  %435 = vmatpush1.msra.mxu0 %v104
  %436 = vmatprep.subr.mxu0 0.0
  %437 = vmatpush1.msra.mxu0 %v105
  %438 = vmatprep.subr.mxu0 0.0
  %439 = vmatpush1.msra.mxu0 %v106
  %440 = vmatprep.subr.mxu0 0.0
  %441 = vmatpush1.msra.mxu0 %v107
  %442 = vmatprep.subr.mxu0 0.0
  %443 = vmatpush1.msra.mxu0 %v108
  %444 = vmatprep.subr.mxu0 0.0
  %445 = vmatpush1.msra.mxu0 %v109
  %446 = vmatprep.subr.mxu0 0.0
  %447 = vmatpush1.msra.mxu0 %v110
  %448 = vmatprep.subr.mxu0 0.0
  %449 = vmatpush1.msra.mxu0 %v111
  %450 = vmatprep.subr.mxu0 0.0
  %451 = vmatpush1.msra.mxu0 %v112
  %452 = vmatprep.subr.mxu0 0.0
  %453 = vmatpush1.msra.mxu0 %v113
  %454 = vmatprep.subr.mxu0 0.0
  %455 = vmatpush1.msra.mxu0 0.0
  %456 = vmatprep.subr.mxu0 0.0
  %457 = vmatpush1.msra.mxu0 0.0
  %458 = vmatprep.subr.mxu0 0.0
  %459 = vmatpush1.msra.mxu0 0.0
  %460 = vmatprep.subr.mxu0 0.0
  %461 = vmatpush1.msra.mxu0 0.0
  %462 = vmatprep.subr.mxu0 0.0
  %463 = vmatpush1.msra.mxu0 0.0
  %464 = vmatprep.subr.mxu0 0.0
  %465 = vmatpush1.msra.mxu0 0.0
  %466 = vmatprep.subr.mxu0 0.0
  %467 = vmatpush1.msra.mxu0 0.0
  %468 = vmatprep.subr.mxu0 0.0
  %469 = vmatpush1.msra.mxu0 0.0
  %470 = vmatprep.subr.mxu0 0.0
  %471 = vmatpush1.msra.mxu0 0.0
  %472 = vmatprep.subr.mxu0 0.0
  %473 = vmatpush1.msra.mxu0 0.0
  %474 = vmatprep.subr.mxu0 0.0
  %475 = vmatpush1.msra.mxu0 0.0
  %476 = vmatprep.subr.mxu0 0.0
  %477 = vmatpush1.msra.mxu0 0.0
  %478 = vmatprep.subr.mxu0 0.0
  %479 = vmatpush1.msra.mxu0 0.0
  %480 = vmatprep.subr.mxu0 0.0
  %481 = vmatpush1.msra.mxu0 0.0
  %482 = vmatprep.subr.mxu0 0.0
  %483 = vmatpush1.msra.mxu0 0.0
  %484 = vmatprep.subr.mxu0 0.0
  %485 = vmatpush1.msra.mxu0 0.0
  %486 = vmatprep.mubr.f32.mxu0 0.0
  %487 = vmatmul.mubr.f32.gmra.mrb[0].mxu0 %v421
  %v488 = vpop.f32.mrb[0].mxu0
  %v489 = vadd.f32 0.0, %v488
  %v490 = vpop.f32.mrb[0].mxu0
  %491 = vdwg.mxu0
  %v492 = vmul.f32 %v489, 0.001953125
  %v493 = vmul.f32 %v492, %v492
  %v495 = vrot.slane %v493, 7
  %v497 = vsub.f32 %v492, %v495
  %v498 = vmax.f32 %v497, 0.0
  %v499 = vld [vmem:[%s5] sm:$0x1]
  %v500 = vadd.f32 %v498, 1e-05
  %v501 = vrsqrt.pop %v500
  %v504 = vunpack.c.l.s4 1966171168
  %v505 = vunpack.c.0.s8 %v504
  %v506 = vlaneseq
  %v507 = vshrl.u32 %v506, 7
  %v508 = vsub.s32 %v505, %v507
  %v509 = vrot.slane %v501, %v508
  %v510 = vcombine.high %v509, %v509
  %v512 = vunpack.c.l.s4 1966171168
  %v513 = vunpack.c.0.s8 %v512
  %v514 = vlaneseq
  %v515 = vshrl.u32 %v514, 7
  %v516 = vsub.s32 %v513, %v515
  %v517 = vrot.slane %v510, %v516
  %v519 = vmul.f32 %v499, %v517
  %v520 = vld [vmem:[%s6] sm:$0x1]
  %v521 = vmul.f32 %v492, %v519
  %v522 = vsub.f32 %v520, %v521
  %v524 = vlaneseq
  %v525 = vshrl.u32 %v524, 7
  %v526 = vsub.s32 0, %v525
  %v527 = vrot.slane %v522, %v526
  %v529 = vsel %vm420, %v519, %v527
  %vm530 = vcmask 64512
  %v532 = vsel %vm530, %v529, 0
  %534 = vmatprep.subr.mxu0 0.0
  %535 = vmatpush1.msra.mxu0 %v97
  %536 = vmatprep.subr.mxu0 0.0
  %537 = vmatpush1.msra.mxu0 0.0
  %538 = vmatprep.subr.mxu0 0.0
  %539 = vmatpush1.msra.mxu0 0.0
  %540 = vmatprep.subr.mxu0 0.0
  %541 = vmatpush1.msra.mxu0 0.0
  %542 = vmatprep.subr.mxu0 0.0
  %543 = vmatpush1.msra.mxu0 0.0
  %544 = vmatprep.subr.mxu0 0.0
  %545 = vmatpush1.msra.mxu0 0.0
  %546 = vmatprep.subr.mxu0 0.0
  %547 = vmatpush1.msra.mxu0 0.0
  %548 = vmatprep.subr.mxu0 0.0
  %549 = vmatpush1.msra.mxu0 0.0
  %550 = vmatprep.subr.mxu0 0.0
  %551 = vmatpush1.msra.mxu0 0.0
  %552 = vmatprep.subr.mxu0 0.0
  %553 = vmatpush1.msra.mxu0 0.0
  %554 = vmatprep.subr.mxu0 0.0
  %555 = vmatpush1.msra.mxu0 0.0
  %556 = vmatprep.subr.mxu0 0.0
  %557 = vmatpush1.msra.mxu0 0.0
  %558 = vmatprep.subr.mxu0 0.0
  %559 = vmatpush1.msra.mxu0 0.0
  %560 = vmatprep.subr.mxu0 0.0
  %561 = vmatpush1.msra.mxu0 0.0
  %562 = vmatprep.subr.mxu0 0.0
  %563 = vmatpush1.msra.mxu0 0.0
  %564 = vmatprep.subr.mxu0 0.0
  %565 = vmatpush1.msra.mxu0 0.0
  %566 = vmatprep.subr.mxu0 0.0
  %567 = vmatpush1.msra.mxu0 0.0
  %568 = vmatprep.subr.mxu0 0.0
  %569 = vmatpush1.msra.mxu0 0.0
  %570 = vmatprep.subr.mxu0 0.0
  %571 = vmatpush1.msra.mxu0 0.0
  %572 = vmatprep.subr.mxu0 0.0
  %573 = vmatpush1.msra.mxu0 0.0
  %574 = vmatprep.subr.mxu0 0.0
  %575 = vmatpush1.msra.mxu0 0.0
  %576 = vmatprep.subr.mxu0 0.0
  %577 = vmatpush1.msra.mxu0 0.0
  %578 = vmatprep.subr.mxu0 0.0
  %579 = vmatpush1.msra.mxu0 0.0
  %580 = vmatprep.subr.mxu0 0.0
  %581 = vmatpush1.msra.mxu0 0.0
  %582 = vmatprep.subr.mxu0 0.0
  %583 = vmatpush1.msra.mxu0 0.0
  %584 = vmatprep.subr.mxu0 0.0
  %585 = vmatpush1.msra.mxu0 0.0
  %586 = vmatprep.subr.mxu0 0.0
  %587 = vmatpush1.msra.mxu0 0.0
  %588 = vmatprep.subr.mxu0 0.0
  %589 = vmatpush1.msra.mxu0 0.0
  %590 = vmatprep.subr.mxu0 0.0
  %591 = vmatpush1.msra.mxu0 0.0
  %592 = vmatprep.subr.mxu0 0.0
  %593 = vmatpush1.msra.mxu0 0.0
  %594 = vmatprep.subr.mxu0 0.0
  %595 = vmatpush1.msra.mxu0 0.0
  %596 = vmatprep.subr.mxu0 0.0
  %597 = vmatpush1.msra.mxu0 0.0
  %598 = vmatprep.mubr.f32.mxu0 0.0
  %599 = vmatmul.mubr.f32.gmra.mrb[0].mxu0 %v532
  %v600 = vpop.f32.mrb[0].mxu0
  %v601 = vadd.f32 0.0, %v600
  %v602 = vpop.f32.mrb[0].mxu0
  %603 = vdwg.mxu0
  %v604 = vlaneseq
  %v605 = vshrl.u32 %v604, 7
  %v606 = vsub.s32 0, %v605
  %v607 = vrot.slane %v601, %v606
  %v608 = vmul.f32 %v383, %v607
  %v609 = vmul.f32 %v384, %v607
  %v610 = vmul.f32 %v385, %v607
  %v611 = vmul.f32 %v386, %v607
  %v612 = vlaneseq
  %v613 = vshrl.u32 %v612, 7
  %v614 = vsub.s32 1, %v613
  %v615 = vrot.slane %v601, %v614
  %v616 = vadd.f32 %v608, %v615
  %v617 = vadd.f32 %v609, %v615
  %v618 = vadd.f32 %v610, %v615
  %v619 = vadd.f32 %v611, %v615
  %v620 = vmax.f32 %v616, 0.0
  %v621 = vmax.f32 %v617, 0.0
  %v622 = vmax.f32 %v618, 0.0
  %v623 = vmax.f32 %v619, 0.0
  %v624 = vpack.c.bf16 %v621, %v620
  %v625 = vpack.c.bf16 %v623, %v622
  %v626 = vld [vmem:[%s2] sm:$0xff]
  %v627 = vld [vmem:[%s2 + $0x8] sm:$0xf]
  %v628 = vld [vmem:[%s2 + $0xc] sm:$0xff]
  %v629 = vld [vmem:[%s2 + $0x14] sm:$0xf]
  %v630 = vld [vmem:[%s2 + $0x18] sm:$0xff]
  %v631 = vld [vmem:[%s2 + $0x20] sm:$0xf]
  %v632 = vld [vmem:[%s2 + $0x24] sm:$0xff]
  %v633 = vld [vmem:[%s2 + $0x2c] sm:$0xf]
  %v634 = vld [vmem:[%s2 + $0x30] sm:$0xff]
  %v635 = vld [vmem:[%s2 + $0x38] sm:$0xf]
  %v636 = vld [vmem:[%s2 + $0x3c] sm:$0xff]
  %v637 = vld [vmem:[%s2 + $0x44] sm:$0xf]
  %v638 = vld [vmem:[%s2 + $0x48] sm:$0xff]
  %v639 = vld [vmem:[%s2 + $0x50] sm:$0xf]
  %v640 = vld [vmem:[%s2 + $0x54] sm:$0xff]
  %v641 = vld [vmem:[%s2 + $0x5c] sm:$0xf]
  %v642 = vld [vmem:[%s2 + $0x60] sm:$0xff]
  %v643 = vld [vmem:[%s2 + $0x68] sm:$0xf]
  %v644 = vld [vmem:[%s2 + $0x6c] sm:$0xff]
  %v645 = vld [vmem:[%s2 + $0x74] sm:$0xf]
  %v646 = vld [vmem:[%s2 + $0x78] sm:$0xff]
  %v647 = vld [vmem:[%s2 + $0x80] sm:$0xf]
  %v648 = vld [vmem:[%s2 + $0x84] sm:$0xff]
  %v649 = vld [vmem:[%s2 + $0x8c] sm:$0xf]
  %v650 = vld [vmem:[%s2 + $0x90] sm:$0xff]
  %v651 = vld [vmem:[%s2 + $0x98] sm:$0xf]
  %v652 = vld [vmem:[%s2 + $0x9c] sm:$0xff]
  %v653 = vld [vmem:[%s2 + $0xa4] sm:$0xf]
  %v654 = vld [vmem:[%s2 + $0xa8] sm:$0xff]
  %v655 = vld [vmem:[%s2 + $0xb0] sm:$0xf]
  %v656 = vld [vmem:[%s2 + $0xb4] sm:$0xff]
  %v657 = vld [vmem:[%s2 + $0xbc] sm:$0xf]
  %v690 = vunpack.c.l.b16 %v626
  %v691 = vunpack.c.h.b16 %v626
  %v692 = vunpack.c.l.b16 %v627
  %v693 = vunpack.c.l.b16 %v628
  %v694 = vunpack.c.h.b16 %v628
  %v695 = vunpack.c.l.b16 %v629
  %v696 = vunpack.c.l.b16 %v630
  %v697 = vunpack.c.h.b16 %v630
  %v698 = vunpack.c.l.b16 %v631
  %v699 = vunpack.c.l.b16 %v632
  %v700 = vunpack.c.h.b16 %v632
  %v701 = vunpack.c.l.b16 %v633
  %v702 = vunpack.c.l.b16 %v634
  %v703 = vunpack.c.h.b16 %v634
  %v704 = vunpack.c.l.b16 %v635
  %v705 = vunpack.c.l.b16 %v636
  %v706 = vunpack.c.h.b16 %v636
  %v707 = vunpack.c.l.b16 %v637
  %v708 = vunpack.c.l.b16 %v638
  %v709 = vunpack.c.h.b16 %v638
  %v710 = vunpack.c.l.b16 %v639
  %v711 = vunpack.c.l.b16 %v640
  %v712 = vunpack.c.h.b16 %v640
  %v713 = vunpack.c.l.b16 %v641
  %v714 = vunpack.c.l.b16 %v642
  %v715 = vunpack.c.h.b16 %v642
  %v716 = vunpack.c.l.b16 %v643
  %v717 = vunpack.c.l.b16 %v644
  %v718 = vunpack.c.h.b16 %v644
  %v719 = vunpack.c.l.b16 %v645
  %v720 = vunpack.c.l.b16 %v646
  %v721 = vunpack.c.h.b16 %v646
  %v722 = vunpack.c.l.b16 %v647
  %v723 = vunpack.c.l.b16 %v648
  %v724 = vunpack.c.h.b16 %v648
  %v725 = vunpack.c.l.b16 %v649
  %v726 = vunpack.c.l.b16 %v650
  %v727 = vunpack.c.h.b16 %v650
  %v728 = vunpack.c.l.b16 %v651
  %v729 = vunpack.c.l.b16 %v652
  %v730 = vunpack.c.h.b16 %v652
  %v731 = vunpack.c.l.b16 %v653
  %v732 = vunpack.c.l.b16 %v654
  %v733 = vunpack.c.h.b16 %v654
  %v734 = vunpack.c.l.b16 %v655
  %v735 = vunpack.c.l.b16 %v656
  %v736 = vunpack.c.h.b16 %v656
  %v737 = vunpack.c.l.b16 %v657
  %v738 = vpack.c.b16 %v693, %v690
  %v739 = vpack.c.b16 %v694, %v691
  %v740 = vpack.c.b16 %v695, %v692
  %v741 = vpack.c.b16 %v699, %v696
  %v742 = vpack.c.b16 %v700, %v697
  %v743 = vpack.c.b16 %v701, %v698
  %v744 = vpack.c.b16 %v705, %v702
  %v745 = vpack.c.b16 %v706, %v703
  %v746 = vpack.c.b16 %v707, %v704
  %v747 = vpack.c.b16 %v711, %v708
  %v748 = vpack.c.b16 %v712, %v709
  %v749 = vpack.c.b16 %v713, %v710
  %v750 = vpack.c.b16 %v717, %v714
  %v751 = vpack.c.b16 %v718, %v715
  %v752 = vpack.c.b16 %v719, %v716
  %v753 = vpack.c.b16 %v723, %v720
  %v754 = vpack.c.b16 %v724, %v721
  %v755 = vpack.c.b16 %v725, %v722
  %v756 = vpack.c.b16 %v729, %v726
  %v757 = vpack.c.b16 %v730, %v727
  %v758 = vpack.c.b16 %v731, %v728
  %v759 = vpack.c.b16 %v735, %v732
  %v760 = vpack.c.b16 %v736, %v733
  %v761 = vpack.c.b16 %v737, %v734
  %786 = vmatprep.subr.bf16.mxu0 %v739
  %787 = vmatpush1.bf16.msra.mxu0 %v738
  %788 = vmatprep.subr.bf16.mxu0 %v742
  %789 = vmatpush1.bf16.msra.mxu0 %v741
  %790 = vmatprep.subr.bf16.mxu0 %v745
  %791 = vmatpush1.bf16.msra.mxu0 %v744
  %792 = vmatprep.subr.bf16.mxu0 %v748
  %793 = vmatpush1.bf16.msra.mxu0 %v747
  %794 = vmatprep.subr.bf16.mxu0 %v751
  %795 = vmatpush1.bf16.msra.mxu0 %v750
  %796 = vmatprep.subr.bf16.mxu0 %v754
  %797 = vmatpush1.bf16.msra.mxu0 %v753
  %798 = vmatprep.subr.bf16.mxu0 %v757
  %799 = vmatpush1.bf16.msra.mxu0 %v756
  %800 = vmatprep.subr.bf16.mxu0 %v760
  %801 = vmatpush1.bf16.msra.mxu0 %v759
  %802 = vmatprep.subr.bf16.mxu0 0
  %803 = vmatpush1.bf16.msra.mxu0 0
  %804 = vmatprep.subr.bf16.mxu0 0
  %805 = vmatpush1.bf16.msra.mxu0 0
  %806 = vmatprep.subr.bf16.mxu0 0
  %807 = vmatpush1.bf16.msra.mxu0 0
  %808 = vmatprep.subr.bf16.mxu0 0
  %809 = vmatpush1.bf16.msra.mxu0 0
  %810 = vmatprep.subr.bf16.mxu0 0
  %811 = vmatpush1.bf16.msra.mxu0 0
  %812 = vmatprep.subr.bf16.mxu0 0
  %813 = vmatpush1.bf16.msra.mxu0 0
  %814 = vmatprep.subr.bf16.mxu0 0
  %815 = vmatpush1.bf16.msra.mxu0 0
  %816 = vmatprep.subr.bf16.mxu0 0
  %817 = vmatpush1.bf16.msra.mxu0 0
  %818 = vmatprep.mubr.bf16.mxu0 0
  %819 = vmatmul.mubr.bf16.gmra.mrb[0].mxu0 %v624
  %v820 = vpop.f32.mrb[0].mxu0
  %v821 = vadd.f32 0.0, %v820
  %v822 = vpop.f32.mrb[0].mxu0
  %v823 = vadd.f32 0.0, %v822
  %v824 = vpop.f32.mrb[0].mxu0
  %v825 = vadd.f32 0.0, %v824
  %v826 = vpop.f32.mrb[0].mxu0
  %v827 = vadd.f32 0.0, %v826
  %828 = vmatprep.mubr.bf16.mxu0 0
  %829 = vmatmul.mubr.bf16.gmra.mrb[0].mxu0 %v625
  %v830 = vpop.f32.mrb[0].mxu0
  %v831 = vadd.f32 0.0, %v830
  %v832 = vpop.f32.mrb[0].mxu0
  %v833 = vadd.f32 0.0, %v832
  %v834 = vpop.f32.mrb[0].mxu0
  %v835 = vadd.f32 0.0, %v834
  %v836 = vpop.f32.mrb[0].mxu0
  %v837 = vadd.f32 0.0, %v836
  %838 = vdwg.mxu0
  %839 = vmatprep.subr.bf16.mxu0 0
  %840 = vmatpush1.bf16.msra.mxu0 %v740
  %841 = vmatprep.subr.bf16.mxu0 0
  %842 = vmatpush1.bf16.msra.mxu0 %v743
  %843 = vmatprep.subr.bf16.mxu0 0
  %844 = vmatpush1.bf16.msra.mxu0 %v746
  %845 = vmatprep.subr.bf16.mxu0 0
  %846 = vmatpush1.bf16.msra.mxu0 %v749
  %847 = vmatprep.subr.bf16.mxu0 0
  %848 = vmatpush1.bf16.msra.mxu0 %v752
  %849 = vmatprep.subr.bf16.mxu0 0
  %850 = vmatpush1.bf16.msra.mxu0 %v755
  %851 = vmatprep.subr.bf16.mxu0 0
  %852 = vmatpush1.bf16.msra.mxu0 %v758
  %853 = vmatprep.subr.bf16.mxu0 0
  %854 = vmatpush1.bf16.msra.mxu0 %v761
  %855 = vmatprep.subr.bf16.mxu0 0
  %856 = vmatpush1.bf16.msra.mxu0 0
  %857 = vmatprep.subr.bf16.mxu0 0
  %858 = vmatpush1.bf16.msra.mxu0 0
  %859 = vmatprep.subr.bf16.mxu0 0
  %860 = vmatpush1.bf16.msra.mxu0 0
  %861 = vmatprep.subr.bf16.mxu0 0
  %862 = vmatpush1.bf16.msra.mxu0 0
  %863 = vmatprep.subr.bf16.mxu0 0
  %864 = vmatpush1.bf16.msra.mxu0 0
  %865 = vmatprep.subr.bf16.mxu0 0
  %866 = vmatpush1.bf16.msra.mxu0 0
  %867 = vmatprep.subr.bf16.mxu0 0
  %868 = vmatpush1.bf16.msra.mxu0 0
  %869 = vmatprep.subr.bf16.mxu0 0
  %870 = vmatpush1.bf16.msra.mxu0 0
  %871 = vmatprep.mubr.bf16.mxu0 0
  %872 = vmatmul.mubr.bf16.gmra.mrb[0].mxu0 %v624
  %v873 = vpop.f32.mrb[0].mxu0
  %v874 = vadd.f32 0.0, %v873
  %v875 = vpop.f32.mrb[0].mxu0
  %v876 = vpop.f32.mrb[0].mxu0
  %v877 = vadd.f32 0.0, %v876
  %v878 = vpop.f32.mrb[0].mxu0
  %879 = vmatprep.mubr.bf16.mxu0 0
  %880 = vmatmul.mubr.bf16.gmra.mrb[0].mxu0 %v625
  %v881 = vpop.f32.mrb[0].mxu0
  %v882 = vadd.f32 0.0, %v881
  %v883 = vpop.f32.mrb[0].mxu0
  %v884 = vpop.f32.mrb[0].mxu0
  %v885 = vadd.f32 0.0, %v884
  %v886 = vpop.f32.mrb[0].mxu0
  %887 = vdwg.mxu0
  %v888 = vrot.slane %v821, 7
  %v889 = vrot.slane %v825, 7
  %v890 = vrot.slane %v831, 7
  %v891 = vrot.slane %v835, 7
  %v892 = vsel %vm341, %v890, %v891
  %v893 = vsel %vm341, %v889, %v890
  %v894 = vsel %vm341, %v888, %v889
  %v895 = vsel %vm341, %v891, %v888
  %v896 = vsel %vm350, %v895, 0.0
  %v897 = vsel %vm351, %v894, 0.0
  %v898 = vsel %vm352, %v893, 0.0
  %v899 = vsel %vm353, %v892, 0.0
  %v900 = vrot.slane %v874, 1
  %v901 = vrot.slane %v877, 1
  %v902 = vrot.slane %v882, 1
  %v903 = vrot.slane %v885, 1
  %v904 = vsel %vm362, %v902, %v903
  %v905 = vsel %vm362, %v901, %v902
  %v906 = vsel %vm362, %v900, %v901
  %v907 = vsel %vm362, %v903, %v900
  %v908 = vsel %vm371, %v906, 0.0
  %v909 = vsel %vm372, %v905, 0.0
  %v910 = vsel %vm373, %v904, 0.0
  %v911 = vsel %vm374, %v907, 0.0
  %v912 = vadd.f32 %v823, %v896
  %v913 = vadd.f32 %v827, %v897
  %v914 = vadd.f32 %v833, %v898
  %v915 = vadd.f32 %v837, %v899
  %v916 = vadd.f32 %v912, %v908
  %v917 = vadd.f32 %v913, %v909
  %v918 = vadd.f32 %v914, %v910
  %v919 = vadd.f32 %v915, %v911
  %v920 = vadd.f32 %v916, %v917
  %v921 = vadd.f32 %v920, %v918
  %v922 = vadd.f32 %v921, %v919
  %v923 = vrot.slane %v922, 4
  %v924 = vadd.f32 %v922, %v923
  %v925 = vrot.slane %v924, 2
  %v926 = vadd.f32 %v924, %v925
  %v927 = vrot.slane %v926, 1
  %v928 = vadd.f32 %v926, %v927
  %v929 = vmul.f32 %v916, %v916
  %v930 = vmul.f32 %v917, %v917
  %v931 = vmul.f32 %v918, %v918
  %v932 = vmul.f32 %v919, %v919
  %v933 = vadd.f32 %v929, %v930
  %v934 = vadd.f32 %v933, %v931
  %v935 = vadd.f32 %v934, %v932
  %v936 = vrot.slane %v935, 4
  %v937 = vadd.f32 %v935, %v936
  %v938 = vrot.slane %v937, 2
  %v939 = vadd.f32 %v937, %v938
  %v940 = vrot.slane %v939, 1
  %v941 = vadd.f32 %v939, %v940
  %v942 = vsel %vm420, %v928, %v941
  %943 = vmatprep.subr.mxu0 0.0
  %944 = vmatpush1.msra.mxu0 %v98
  %945 = vmatprep.subr.mxu0 0.0
  %946 = vmatpush1.msra.mxu0 %v99
  %947 = vmatprep.subr.mxu0 0.0
  %948 = vmatpush1.msra.mxu0 %v100
  %949 = vmatprep.subr.mxu0 0.0
  %950 = vmatpush1.msra.mxu0 %v101
  %951 = vmatprep.subr.mxu0 0.0
  %952 = vmatpush1.msra.mxu0 %v102
  %953 = vmatprep.subr.mxu0 0.0
  %954 = vmatpush1.msra.mxu0 %v103
  %955 = vmatprep.subr.mxu0 0.0
  %956 = vmatpush1.msra.mxu0 %v104
  %957 = vmatprep.subr.mxu0 0.0
  %958 = vmatpush1.msra.mxu0 %v105
  %959 = vmatprep.subr.mxu0 0.0
  %960 = vmatpush1.msra.mxu0 %v106
  %961 = vmatprep.subr.mxu0 0.0
  %962 = vmatpush1.msra.mxu0 %v107
  %963 = vmatprep.subr.mxu0 0.0
  %964 = vmatpush1.msra.mxu0 %v108
  %965 = vmatprep.subr.mxu0 0.0
  %966 = vmatpush1.msra.mxu0 %v109
  %967 = vmatprep.subr.mxu0 0.0
  %968 = vmatpush1.msra.mxu0 %v110
  %969 = vmatprep.subr.mxu0 0.0
  %970 = vmatpush1.msra.mxu0 %v111
  %971 = vmatprep.subr.mxu0 0.0
  %972 = vmatpush1.msra.mxu0 %v112
  %973 = vmatprep.subr.mxu0 0.0
  %974 = vmatpush1.msra.mxu0 %v113
  %975 = vmatprep.subr.mxu0 0.0
  %976 = vmatpush1.msra.mxu0 0.0
  %977 = vmatprep.subr.mxu0 0.0
  %978 = vmatpush1.msra.mxu0 0.0
  %979 = vmatprep.subr.mxu0 0.0
  %980 = vmatpush1.msra.mxu0 0.0
  %981 = vmatprep.subr.mxu0 0.0
  %982 = vmatpush1.msra.mxu0 0.0
  %983 = vmatprep.subr.mxu0 0.0
  %984 = vmatpush1.msra.mxu0 0.0
  %985 = vmatprep.subr.mxu0 0.0
  %986 = vmatpush1.msra.mxu0 0.0
  %987 = vmatprep.subr.mxu0 0.0
  %988 = vmatpush1.msra.mxu0 0.0
  %989 = vmatprep.subr.mxu0 0.0
  %990 = vmatpush1.msra.mxu0 0.0
  %991 = vmatprep.subr.mxu0 0.0
  %992 = vmatpush1.msra.mxu0 0.0
  %993 = vmatprep.subr.mxu0 0.0
  %994 = vmatpush1.msra.mxu0 0.0
  %995 = vmatprep.subr.mxu0 0.0
  %996 = vmatpush1.msra.mxu0 0.0
  %997 = vmatprep.subr.mxu0 0.0
  %998 = vmatpush1.msra.mxu0 0.0
  %999 = vmatprep.subr.mxu0 0.0
  %1000 = vmatpush1.msra.mxu0 0.0
  %1001 = vmatprep.subr.mxu0 0.0
  %1002 = vmatpush1.msra.mxu0 0.0
  %1003 = vmatprep.subr.mxu0 0.0
  %1004 = vmatpush1.msra.mxu0 0.0
  %1005 = vmatprep.subr.mxu0 0.0
  %1006 = vmatpush1.msra.mxu0 0.0
  %1007 = vmatprep.mubr.f32.mxu0 0.0
  %1008 = vmatmul.mubr.f32.gmra.mrb[0].mxu0 %v942
  %v1009 = vpop.f32.mrb[0].mxu0
  %v1010 = vadd.f32 0.0, %v1009
  %v1011 = vpop.f32.mrb[0].mxu0
  %1012 = vdwg.mxu0
  %v1013 = vmul.f32 %v1010, 0.001953125
  %v1014 = vmul.f32 %v1013, %v1013
  %v1016 = vrot.slane %v1014, 7
  %v1018 = vsub.f32 %v1013, %v1016
  %v1019 = vmax.f32 %v1018, 0.0
  %v1020 = vld [vmem:[%s7] sm:$0x1]
  %v1021 = vadd.f32 %v1019, 1e-05
  %v1022 = vrsqrt.pop %v1021
  %v1025 = vunpack.c.l.s4 1966171168
  %v1026 = vunpack.c.0.s8 %v1025
  %v1027 = vlaneseq
  %v1028 = vshrl.u32 %v1027, 7
  %v1029 = vsub.s32 %v1026, %v1028
  %v1030 = vrot.slane %v1022, %v1029
  %v1031 = vcombine.high %v1030, %v1030
  %v1033 = vunpack.c.l.s4 1966171168
  %v1034 = vunpack.c.0.s8 %v1033
  %v1035 = vlaneseq
  %v1036 = vshrl.u32 %v1035, 7
  %v1037 = vsub.s32 %v1034, %v1036
  %v1038 = vrot.slane %v1031, %v1037
  %v1040 = vmul.f32 %v1020, %v1038
  %v1041 = vld [vmem:[%s8] sm:$0x1]
  %v1042 = vmul.f32 %v1013, %v1040
  %v1043 = vsub.f32 %v1041, %v1042
  %v1045 = vlaneseq
  %v1046 = vshrl.u32 %v1045, 7
  %v1047 = vsub.s32 0, %v1046
  %v1048 = vrot.slane %v1043, %v1047
  %v1050 = vsel %vm420, %v1040, %v1048
  %v1052 = vsel %vm530, %v1050, 0
  %1054 = vmatprep.subr.mxu0 0.0
  %1055 = vmatpush1.msra.mxu0 %v97
  %1056 = vmatprep.subr.mxu0 0.0
  %1057 = vmatpush1.msra.mxu0 0.0
  %1058 = vmatprep.subr.mxu0 0.0
  %1059 = vmatpush1.msra.mxu0 0.0
  %1060 = vmatprep.subr.mxu0 0.0
  %1061 = vmatpush1.msra.mxu0 0.0
  %1062 = vmatprep.subr.mxu0 0.0
  %1063 = vmatpush1.msra.mxu0 0.0
  %1064 = vmatprep.subr.mxu0 0.0
  %1065 = vmatpush1.msra.mxu0 0.0
  %1066 = vmatprep.subr.mxu0 0.0
  %1067 = vmatpush1.msra.mxu0 0.0
  %1068 = vmatprep.subr.mxu0 0.0
  %1069 = vmatpush1.msra.mxu0 0.0
  %1070 = vmatprep.subr.mxu0 0.0
  %1071 = vmatpush1.msra.mxu0 0.0
  %1072 = vmatprep.subr.mxu0 0.0
  %1073 = vmatpush1.msra.mxu0 0.0
  %1074 = vmatprep.subr.mxu0 0.0
  %1075 = vmatpush1.msra.mxu0 0.0
  %1076 = vmatprep.subr.mxu0 0.0
  %1077 = vmatpush1.msra.mxu0 0.0
  %1078 = vmatprep.subr.mxu0 0.0
  %1079 = vmatpush1.msra.mxu0 0.0
  %1080 = vmatprep.subr.mxu0 0.0
  %1081 = vmatpush1.msra.mxu0 0.0
  %1082 = vmatprep.subr.mxu0 0.0
  %1083 = vmatpush1.msra.mxu0 0.0
  %1084 = vmatprep.subr.mxu0 0.0
  %1085 = vmatpush1.msra.mxu0 0.0
  %1086 = vmatprep.subr.mxu0 0.0
  %1087 = vmatpush1.msra.mxu0 0.0
  %1088 = vmatprep.subr.mxu0 0.0
  %1089 = vmatpush1.msra.mxu0 0.0
  %1090 = vmatprep.subr.mxu0 0.0
  %1091 = vmatpush1.msra.mxu0 0.0
  %1092 = vmatprep.subr.mxu0 0.0
  %1093 = vmatpush1.msra.mxu0 0.0
  %1094 = vmatprep.subr.mxu0 0.0
  %1095 = vmatpush1.msra.mxu0 0.0
  %1096 = vmatprep.subr.mxu0 0.0
  %1097 = vmatpush1.msra.mxu0 0.0
  %1098 = vmatprep.subr.mxu0 0.0
  %1099 = vmatpush1.msra.mxu0 0.0
  %1100 = vmatprep.subr.mxu0 0.0
  %1101 = vmatpush1.msra.mxu0 0.0
  %1102 = vmatprep.subr.mxu0 0.0
  %1103 = vmatpush1.msra.mxu0 0.0
  %1104 = vmatprep.subr.mxu0 0.0
  %1105 = vmatpush1.msra.mxu0 0.0
  %1106 = vmatprep.subr.mxu0 0.0
  %1107 = vmatpush1.msra.mxu0 0.0
  %1108 = vmatprep.subr.mxu0 0.0
  %1109 = vmatpush1.msra.mxu0 0.0
  %1110 = vmatprep.subr.mxu0 0.0
  %1111 = vmatpush1.msra.mxu0 0.0
  %1112 = vmatprep.subr.mxu0 0.0
  %1113 = vmatpush1.msra.mxu0 0.0
  %1114 = vmatprep.subr.mxu0 0.0
  %1115 = vmatpush1.msra.mxu0 0.0
  %1116 = vmatprep.subr.mxu0 0.0
  %1117 = vmatpush1.msra.mxu0 0.0
  %1118 = vmatprep.mubr.f32.mxu0 0.0
  %1119 = vmatmul.mubr.f32.gmra.mrb[0].mxu0 %v1052
  %v1120 = vpop.f32.mrb[0].mxu0
  %v1121 = vadd.f32 0.0, %v1120
  %v1122 = vpop.f32.mrb[0].mxu0
  %1123 = vdwg.mxu0
  %v1124 = vlaneseq
  %v1125 = vshrl.u32 %v1124, 7
  %v1126 = vsub.s32 0, %v1125
  %v1127 = vrot.slane %v1121, %v1126
  %v1128 = vmul.f32 %v916, %v1127
  %v1129 = vmul.f32 %v917, %v1127
  %v1130 = vmul.f32 %v918, %v1127
  %v1131 = vmul.f32 %v919, %v1127
  %v1132 = vlaneseq
  %v1133 = vshrl.u32 %v1132, 7
  %v1134 = vsub.s32 1, %v1133
  %v1135 = vrot.slane %v1121, %v1134
  %v1136 = vadd.f32 %v1128, %v1135
  %v1137 = vadd.f32 %v1129, %v1135
  %v1138 = vadd.f32 %v1130, %v1135
  %v1139 = vadd.f32 %v1131, %v1135
  %v1140 = vadd.f32 %v1136, %v394
  %v1141 = vadd.f32 %v1137, %v395
  %v1142 = vadd.f32 %v1138, %v396
  %v1143 = vadd.f32 %v1139, %v397
  %v1144 = vmax.f32 %v1140, 0.0
  %v1145 = vmax.f32 %v1141, 0.0
  %v1146 = vmax.f32 %v1142, 0.0
  %v1147 = vmax.f32 %v1143, 0.0
  %1148 = vst [vmem:[%s10] sm:$0xff] %v1144
  %1149 = vst [vmem:[%s10 + $0x8] sm:$0xff] %v1145
  %1150 = vst [vmem:[%s10 + $0x10] sm:$0xff] %v1146
  %1151 = vst [vmem:[%s10 + $0x18] sm:$0xff] %v1147
  // Predicated region
  $region42: #{basic_block_forward.1} parent=0 // pred_check
    _
  $region43: #{basic_block_forward.1} parent=0 // pred_check_branch
    %1153 = sbr.rel (0) target = $region45
  $region44: #{basic_block_forward.1} parent=0 // pred_region
    _
  $region45: #{basic_block_forward.1} parent=0 // pred_fallthru
    _
  // Predicated region
  $region46: #{basic_block_forward.1} parent=0 // pred_check
    _
  $region47: #{basic_block_forward.1} parent=0 // pred_check_branch
    %1155 = sbr.rel (0) target = $region49
  $region48: #{basic_block_forward.1} parent=0 // pred_region
    _
  $region49: #{basic_block_forward.1} parent=0 // pred_fallthru
    _

</llo_original>
